<compile_context>
chip_gen: v7x
topology: tpu7x:2x2x1
jax: 0.10.0
libtpu: 0.0.40
codegen_flags: <defaults>
</compile_context>

<pallas_src>
import functools

import jax
import jax.numpy as jnp
from jax.experimental import pallas as pl
from jax.experimental.pallas import tpu as pltpu


def _round_up(x, m):
    return ((x + m - 1) // m) * m


def _multihead_output_kernel(emb_ref, whead_ref, wfused_ref, out_ref, mixed_ref, *,
                             num_heads, num_projections, dim_per_head):
    """Grid step (i, j): row tile i x vocab tile j.

    j == 0 : compute softmax mixing weights and fold them into the embedding
             slices (vocab-invariant) -> stash in `mixed_ref` (VMEM scratch).
    all j  : one MXU matmul (TM, P*d) @ (P*d, TN) -> (TM, TN) logits tile.
    """

    @pl.when(pl.program_id(1) == 0)
    def _():
        emb = emb_ref[...]                                       # (TM, E), native dtype
        # mixing weights: softmax(emb @ W_head^T); W_head pre-transposed to (E, HP).
        hw_logits = jnp.dot(emb, whead_ref[...],
                            preferred_element_type=jnp.float32)  # (TM, HP)
        hw_logits = hw_logits - jnp.max(hw_logits, axis=-1, keepdims=True)
        hw_exp = jnp.exp(hw_logits)
        # exact divide (approx reciprocal broke strict parity with the reference)
        hw = hw_exp / jnp.sum(hw_exp, axis=-1, keepdims=True)    # (TM, HP)

        # fold the mixing weights into the embedding slices (cheap f32 VPU work,
        # done once per row tile — not once per vocab tile).
        H, P, d = num_heads, num_projections, dim_per_head
        emb_f32 = emb.astype(jnp.float32)
        parts = []
        for p in range(P):
            m_p = hw[:, p * H:p * H + 1] * emb_f32[:, 0:d]       # h = 0 term
            for h in range(1, H):
                hp_idx = p * H + h                               # torch.cat(dim=2) order
                m_p = m_p + hw[:, hp_idx:hp_idx + 1] * emb_f32[:, h * d:(h + 1) * d]
            parts.append(m_p)
        mixed = jnp.concatenate(parts, axis=-1)                  # (TM, P*d)
        mixed_ref[...] = mixed.astype(mixed_ref.dtype)

    # hot loop: single MXU matmul against the pre-normalized fused weight tile.
    out_ref[...] = jnp.dot(mixed_ref[...], wfused_ref[...],
                           preferred_element_type=jnp.float32).astype(out_ref.dtype)


def prepare_weights(w_proj, w_head, *, num_heads, num_projections, tile_n=1024):
    """One-shot weight preprocessing. Cache and reuse the result across forwards.

    w_proj: (P, V, d)  (nn.Linear(dim_per_head, vocab).weight per projection)
    w_head: (H*P, E)   (nn.Linear(embedding_dim, H*P).weight)
    Returns (w_fused_padded (P*d, Vp), w_head_t (E, H*P)).
    """
    P, V, d = w_proj.shape
    multi = (num_heads > 1) or (num_projections > 1)
    wp32 = w_proj.astype(jnp.float32)
    if multi:
        # PyTorch: layer.weight.div_(norm(layer.weight, dim=1, keepdim=True))
        wp32 = wp32 / jnp.sqrt(jnp.sum(wp32 * wp32, axis=2, keepdims=True))
    # (P, V, d) -> (P, d, V) -> (P*d, V); keep the weights' native dtype (bf16 stays bf16)
    w_fused = jnp.transpose(wp32, (0, 2, 1)).reshape(P * d, V).astype(w_proj.dtype)
    w_head_t = jnp.transpose(w_head, (1, 0))                     # (E, H*P)

    tile_n = min(tile_n, _round_up(V, 128))
    Vp = _round_up(V, tile_n)
    if Vp != V:
        w_fused = jnp.pad(w_fused, ((0, 0), (0, Vp - V)))
    return w_fused, w_head_t


def multihead_output(embeds, w_proj, w_head, *, num_heads, num_projections,
                     tile_m=512, tile_n=1024, prepared=None):
    """embeds: (B, S, E); w_proj: (P, V, d); w_head: (H*P, E) -> (B, S, V).

    `prepared` = prepare_weights(...) output; pass it to avoid per-call weight prep.
    """
    B, S, E = embeds.shape
    P, V, d = w_proj.shape
    assert P == num_projections and d * num_heads == E
    HP = num_heads * num_projections
    PD = P * d
    M = B * S

    if prepared is None:
        prepared = prepare_weights(w_proj, w_head, num_heads=num_heads,
                                   num_projections=num_projections, tile_n=tile_n)
    w_fused, w_head_t = prepared

    # tile sizes + zero-padded tails (no divisibility requirements on M / V)
    tile_m = min(tile_m, _round_up(M, 8))
    tile_n = min(tile_n, _round_up(V, 128))
    Mp = _round_up(M, tile_m)
    Vp = _round_up(V, tile_n)
    assert w_fused.shape == (PD, Vp), "prepared weights padded for a different tile_n"

    x = embeds.reshape(M, E)
    if Mp != M:
        x = jnp.pad(x, ((0, Mp - M), (0, 0)))

    kernel = functools.partial(
        _multihead_output_kernel,
        num_heads=num_heads, num_projections=num_projections, dim_per_head=d)

    out = pl.pallas_call(
        kernel,
        out_shape=jax.ShapeDtypeStruct((Mp, Vp), embeds.dtype),
        grid_spec=pltpu.PrefetchScalarGridSpec(
            num_scalar_prefetch=0,
            grid=(Mp // tile_m, Vp // tile_n),
            in_specs=[
                pl.BlockSpec((tile_m, E), lambda i, j: (i, 0)),    # embedding rows (reused over j)
                pl.BlockSpec((E, HP), lambda i, j: (0, 0)),        # head weight (tiny, resident)
                pl.BlockSpec((PD, tile_n), lambda i, j: (0, j)),   # fused projection weights
            ],
            out_specs=pl.BlockSpec((tile_m, tile_n), lambda i, j: (i, j)),
            # vocab-invariant "mixed" activations, computed once per row tile
            scratch_shapes=[pltpu.VMEM((tile_m, PD), w_fused.dtype)],
        ),
        compiler_params=pltpu.CompilerParams(
            dimension_semantics=("parallel", "arbitrary"),
            vmem_limit_bytes=48 * 1024 * 1024),
    )(x, w_head_t, w_fused)

    return out[:M, :V].reshape(B, S, V)


def _reference(embeds, w_proj, w_head, num_heads, num_projections, precision):
    """Pure-JAX mirror of the PyTorch forward (multi-head branch)."""
    B, S, E = embeds.shape
    P, V, d = w_proj.shape
    emb_c = embeds.reshape(B, S, num_heads, d)
    wn = w_proj / jnp.linalg.norm(w_proj, axis=2, keepdims=True)
    splits = [jnp.einsum('bshd,vd->bshv', emb_c, wn[p], precision=precision)
              for p in range(P)]
    logits_split = jnp.concatenate(splits, axis=2)               # (B, S, H*P, V)
    hw = jax.nn.softmax(
        jnp.einsum('bse,je->bsj', embeds, w_head, precision=precision),
        axis=-1)[..., None]                                      # (B, S, H*P, 1)
    return jnp.sum(logits_split * hw, axis=2)


if __name__ == "__main__":
    # Small, MultiHeadOutput-consistent shapes.
    B, S = 2, 8
    embedding_dim = 32
    vocab_size = 128
    num_heads = 2
    num_projections = 2
    dim_per_head = embedding_dim // num_heads

    key = jax.random.PRNGKey(0)
    k_emb, k_proj, k_head = jax.random.split(key, 3)

    embeds = jax.random.normal(k_emb, (B, S, embedding_dim), dtype=jnp.float32)
    # nn.Linear(dim_per_head, vocab_size, bias=False).weight -> (vocab, dim_per_head)
    w_proj = jax.random.normal(
        k_proj, (num_projections, vocab_size, dim_per_head), dtype=jnp.float32) * 0.1
    # nn.Linear(embedding_dim, num_heads * num_projections, bias=False).weight
    w_head = jax.random.normal(
        k_head, (num_heads * num_projections, embedding_dim), dtype=jnp.float32) * 0.1

    # weight prep done once (cacheable across forward calls)
    prepared = prepare_weights(w_proj, w_head, num_heads=num_heads,
                               num_projections=num_projections, tile_n=1024)

    logits = multihead_output(embeds, w_proj, w_head,
                              num_heads=num_heads,
                              num_projections=num_projections,
                              prepared=prepared)
    logits = jax.block_until_ready(logits)
    assert logits.shape == (B, S, vocab_size)

    # High-precision ground truth, plus the same math at the backend's DEFAULT matmul
    # precision. The default/highest gap measures the bf16-MXU-pass rounding scale on
    # this backend; budget a few x that (covers the kernel's own rounding whether it
    # runs compiled with accurate multi-pass f32 matmuls or interpreted at DEFAULT).
    ref_hi = _reference(embeds, w_proj, w_head, num_heads, num_projections,
                        precision=jax.lax.Precision.HIGHEST)
    ref_lo = _reference(embeds, w_proj, w_head, num_heads, num_projections,
                        precision=jax.lax.Precision.DEFAULT)
    prec_noise = float(jnp.max(jnp.abs(ref_hi - ref_lo)))
    tol = 1e-4 + 5.0 * prec_noise
    err = float(jnp.max(jnp.abs(logits - ref_hi)))
    assert err <= tol, f"mismatch vs reference: max|err|={err:.3e} > tol={tol:.3e}"

    print("KERNEL_OK")
</pallas_src>

<mosaic_0001>
module attributes {stable_mosaic.version = 11 : i64} {
  func.func @_multihead_output_kernel(%arg0: i32, %arg1: i32, %arg2: memref<16x32xf32, #tpu.memory_space<vmem>>, %arg3: memref<32x4xf32, #tpu.memory_space<vmem>>, %arg4: memref<32x128xf32, #tpu.memory_space<vmem>>, %arg5: memref<16x128xf32, #tpu.memory_space<vmem>>, %arg6: memref<16x32xf32, #tpu.memory_space<vmem>>) attributes {dimension_semantics = [#tpu.dimension_semantics<parallel>, #tpu.dimension_semantics<arbitrary>], iteration_bounds = array<i64: 1, 1>, scalar_prefetch = 0 : i64, scratch_operands = 1 : i64, tpu.core_type = #tpu.core_type<tc>, window_params = [{transform_indices = @transform_0, window_bounds = array<i64: 16, 32>}, {pipeline_mode = #tpu.pipeline_mode<synchronous>, transform_indices = @transform_1, window_bounds = array<i64: 32, 4>}, {transform_indices = @transform_2, window_bounds = array<i64: 32, 128>}, {transform_indices = @transform_3, window_bounds = array<i64: 16, 128>}]} {
    %c0_i32 = arith.constant 0 : i32
    %0 = arith.cmpi eq, %arg1, %c0_i32 : i32
    %1 = arith.extui %0 : i1 to i32
    %c0_i32_0 = arith.constant 0 : i32
    %2 = arith.cmpi ne, %1, %c0_i32_0 : i32
    scf.if %2 {
      %c0_6 = arith.constant 0 : index
      %c0_7 = arith.constant 0 : index
      %7 = vector.load %arg2[%c0_6, %c0_7] : memref<16x32xf32, #tpu.memory_space<vmem>>, vector<16x32xf32>
      %c0_8 = arith.constant 0 : index
      %c0_9 = arith.constant 0 : index
      %8 = vector.load %arg3[%c0_8, %c0_9] : memref<32x4xf32, #tpu.memory_space<vmem>>, vector<32x4xf32>
      %cst_10 = arith.constant dense<0.000000e+00> : vector<16x4xf32>
      %9 = tpu.matmul %7, %8, %cst_10 {dimension_numbers = #tpu.dot_dimension_numbers<[1], [0], [0], [1], [0, 0, 1, 1], [], []>} : vector<16x32xf32>, vector<32x4xf32>, vector<16x4xf32> -> vector<16x4xf32>
      %cst_11 = arith.constant dense<0xFF800000> : vector<16xf32>
      %10 = vector.multi_reduction <maximumf>, %9, %cst_11 [1] : vector<16x4xf32> to vector<16xf32>
      %11 = vector.shape_cast %10 : vector<16xf32> to vector<16x1xf32>
      %12 = vector.broadcast %11 : vector<16x1xf32> to vector<16x4xf32>
      %13 = arith.subf %9, %12 : vector<16x4xf32>
      %14 = math.exp %13 : vector<16x4xf32>
      %cst_12 = arith.constant dense<0.000000e+00> : vector<16xf32>
      %15 = vector.multi_reduction <add>, %14, %cst_12 [1] : vector<16x4xf32> to vector<16xf32>
      %16 = vector.shape_cast %15 : vector<16xf32> to vector<16x1xf32>
      %17 = vector.broadcast %16 : vector<16x1xf32> to vector<16x4xf32>
      %18 = arith.divf %14, %17 : vector<16x4xf32>
      %19 = vector.extract_strided_slice %18 {offsets = [0, 0], sizes = [16, 1], strides = [1, 1]} : vector<16x4xf32> to vector<16x1xf32>
      %20 = vector.extract_strided_slice %7 {offsets = [0, 0], sizes = [16, 16], strides = [1, 1]} : vector<16x32xf32> to vector<16x16xf32>
      %21 = vector.broadcast %19 : vector<16x1xf32> to vector<16x16xf32>
      %22 = arith.mulf %21, %20 : vector<16x16xf32>
      %23 = vector.extract_strided_slice %18 {offsets = [0, 1], sizes = [16, 1], strides = [1, 1]} : vector<16x4xf32> to vector<16x1xf32>
      %24 = vector.extract_strided_slice %7 {offsets = [0, 16], sizes = [16, 16], strides = [1, 1]} : vector<16x32xf32> to vector<16x16xf32>
      %25 = vector.broadcast %23 : vector<16x1xf32> to vector<16x16xf32>
      %26 = arith.mulf %25, %24 : vector<16x16xf32>
      %27 = arith.addf %22, %26 : vector<16x16xf32>
      %28 = vector.extract_strided_slice %18 {offsets = [0, 2], sizes = [16, 1], strides = [1, 1]} : vector<16x4xf32> to vector<16x1xf32>
      %29 = vector.extract_strided_slice %7 {offsets = [0, 0], sizes = [16, 16], strides = [1, 1]} : vector<16x32xf32> to vector<16x16xf32>
      %30 = vector.broadcast %28 : vector<16x1xf32> to vector<16x16xf32>
      %31 = arith.mulf %30, %29 : vector<16x16xf32>
      %32 = vector.extract_strided_slice %18 {offsets = [0, 3], sizes = [16, 1], strides = [1, 1]} : vector<16x4xf32> to vector<16x1xf32>
      %33 = vector.extract_strided_slice %7 {offsets = [0, 16], sizes = [16, 16], strides = [1, 1]} : vector<16x32xf32> to vector<16x16xf32>
      %34 = vector.broadcast %32 : vector<16x1xf32> to vector<16x16xf32>
      %35 = arith.mulf %34, %33 : vector<16x16xf32>
      %36 = arith.addf %31, %35 : vector<16x16xf32>
      %37 = tpu.concatenate %27, %36 in 1 : vector<16x16xf32>, vector<16x16xf32> -> vector<16x32xf32>
      %c0_13 = arith.constant 0 : index
      %c0_14 = arith.constant 0 : index
      %38 = vector.load %arg6[%c0_13, %c0_14] : memref<16x32xf32, #tpu.memory_space<vmem>>, vector<16x32xf32>
      tpu.vector_store %arg6[%c0_13, %c0_14], %37 {strides = array<i32>} : memref<16x32xf32, #tpu.memory_space<vmem>>, vector<16x32xf32>,
    } else {
    }
    %c0 = arith.constant 0 : index
    %c0_1 = arith.constant 0 : index
    %3 = vector.load %arg6[%c0, %c0_1] : memref<16x32xf32, #tpu.memory_space<vmem>>, vector<16x32xf32>
    %c0_2 = arith.constant 0 : index
    %c0_3 = arith.constant 0 : index
    %4 = vector.load %arg4[%c0_2, %c0_3] : memref<32x128xf32, #tpu.memory_space<vmem>>, vector<32x128xf32>
    %cst = arith.constant dense<0.000000e+00> : vector<16x128xf32>
    %5 = tpu.matmul %3, %4, %cst {dimension_numbers = #tpu.dot_dimension_numbers<[1], [0], [0], [1], [0, 0, 1, 1], [], []>} : vector<16x32xf32>, vector<32x128xf32>, vector<16x128xf32> -> vector<16x128xf32>
    %c0_4 = arith.constant 0 : index
    %c0_5 = arith.constant 0 : index
    %6 = vector.load %arg5[%c0_4, %c0_5] : memref<16x128xf32, #tpu.memory_space<vmem>>, vector<16x128xf32>
    tpu.vector_store %arg5[%c0_4, %c0_5], %5 {strides = array<i32>} : memref<16x128xf32, #tpu.memory_space<vmem>>, vector<16x128xf32>,
    return
  }
  func.func @transform_0(%arg0: i32, %arg1: i32) -> (i32, i32) {
    %c0_i32 = arith.constant 0 : i32
    %c0_i32_0 = arith.constant 0 : i32
    return %arg0, %c0_i32 : i32, i32
  }
  func.func @transform_1(%arg0: i32, %arg1: i32) -> (i32, i32) {
    %c0_i32 = arith.constant 0 : i32
    %c0_i32_0 = arith.constant 0 : i32
    %c0_i32_1 = arith.constant 0 : i32
    return %c0_i32, %c0_i32_0 : i32, i32
  }
  func.func @transform_2(%arg0: i32, %arg1: i32) -> (i32, i32) {
    %c0_i32 = arith.constant 0 : i32
    %c0_i32_0 = arith.constant 0 : i32
    return %c0_i32, %arg1 : i32, i32
  }
  func.func @transform_3(%arg0: i32, %arg1: i32) -> (i32, i32) {
    %c0_i32 = arith.constant 0 : i32
    return %arg0, %arg1 : i32, i32
  }
}

</mosaic_0001>

<llo_original>
// kernel: tpu_custom_call.1
$region0: #{tpu_custom_call.1}
  #allocation0 [shape = 'u32[]', space=smem, size = 0x4, offset = 0x4, fixed_abs, tag = 'smem constant byte address 0x4 - core index']
  #allocation1 [shape = 'u32[144,128]{1,0:T(1,128)}', space=vmem, size = 0x12000, scoped, tag = 'internal scratch']
  #allocation2 [shape = 'f32[16,32]{1,0:T(8,128)}', space=vmem, size = 0x2000, scoped, tag = 'scratch operand']
  %s0 = inlined_call_operand.hbm [shape: f32[16,32], index: 0, kind: input, shape index: {}]
  %s1 = inlined_call_operand.vmem [shape: f32[32,4], index: 1, kind: input, shape index: {}]
  %s2 = inlined_call_operand.vmem [shape: f32[32,128], index: 2, kind: input, shape index: {}]
  %s3 = inlined_call_operand.hbm [shape: f32[16,128], index: 3, kind: output, shape index: {}]
  %s4 = sld [smem:[#allocation0]]
  $region30: #{tpu_custom_call.1} parent=0
    _
  %s6 = ssub.s32 1, %s4
  %s7 = scalar_select 0, %s6, %s4
  $region1: #{tpu_custom_call.1} parent=0
    #allocation3 [shape = 'u8[8192]{0}', space=vmem, size = 0x2000, scoped, tag = 'input window, operand 0, single buffered']
    #allocation4 [shape = 's32[1]{0}', space=sflag, size = 0x4, scoped, tag = 'scoped memory for tpu_custom_call.1']
    #allocation5 [shape = 's32[1]{0}', space=sflag, size = 0x4, scoped, tag = 'scoped memory for tpu_custom_call.1']
    #allocation6 [shape = 'u8[8192]{0}', space=vmem, size = 0x2000, scoped, tag = 'output window, operand 0, single buffered']
    %8 = vsyncpa [#allocation4], 0
    %9 = vsyncpa [#allocation5], 0
    // Predicated region
    $region2: #{tpu_custom_call.1} parent=1 // pred_check
      _
    $region3: #{tpu_custom_call.1} parent=1 // pred_check_branch
      %11 = sbr.rel (0) target = $region5
    $region4: #{tpu_custom_call.1} parent=1 // pred_region
      %s13 = ssub.s32 256, 256
      %14 = vsyncadd [#allocation4], %s13
      %s15 = sshll.u32 [#allocation3], 4
      %s16 = int_to_ptr.vmem [resolvable:$true] %s15
      %21 = dma.hbm_to_vmem [thread:$0]  %s0, 256, %s16, [#allocation4], 128, 128, 8
    $region5: #{tpu_custom_call.1} parent=1 // pred_fallthru
      _
    // Predicated region
    $region6: #{tpu_custom_call.1} parent=1 // pred_check
      _
    $region7: #{tpu_custom_call.1} parent=1 // pred_check_branch
      %23 = sbr.rel (0) target = $region9
    $region8: #{tpu_custom_call.1} parent=1 // pred_region
      _
    $region9: #{tpu_custom_call.1} parent=1 // pred_fallthru
      _
    // Predicated region
    $region10: #{tpu_custom_call.1} parent=1 // pred_check
      _
    $region11: #{tpu_custom_call.1} parent=1 // pred_check_branch
      %25 = sbr.rel (0) target = $region13
    $region12: #{tpu_custom_call.1} parent=1 // pred_region
      _
    $region13: #{tpu_custom_call.1} parent=1 // pred_fallthru
      _
    // Predicated region
    $region14: #{tpu_custom_call.1} parent=1 // pred_check
      _
    $region15: #{tpu_custom_call.1} parent=1 // pred_check_branch
      %27 = sbr.rel (0) target = $region17
    $region16: #{tpu_custom_call.1} parent=1 // pred_region
      %28 = dma.done [#allocation4], 256
    $region17: #{tpu_custom_call.1} parent=1 // pred_fallthru
      _
    %p29 = scmp.eq.s32.totalorder 0, 0
    // Predicated region
    $region18: #{tpu_custom_call.1} parent=1 // pred_check
      %p30 = pneg %p29
    $region19: #{tpu_custom_call.1} parent=1 // pred_check_branch
      %32 = sbr.rel (%p30) target = $region21
    $region20: #{tpu_custom_call.1} parent=1 // pred_region
      %v33 = vld [vmem:[#allocation3] sm:$0xff]
      %v34 = vld [vmem:[#allocation3 + $0x8] sm:$0xff]
      %v35 = vld [vmem:[%s1] sm:$0xff]
      %v36 = vld [vmem:[%s1 + $0x8] sm:$0xff]
      %v37 = vld [vmem:[%s1 + $0x10] sm:$0xff]
      %v38 = vld [vmem:[%s1 + $0x18] sm:$0xff]
      %vm39 = vcmask 261120
      %v41 = vsel %vm39, %v33, 0
      %v44 = vsel %vm39, %v34, 0
      %46 = vmatprep.subr.mxu0 0.0
      %47 = vmatpush1.msra.mxu0 %v35
      %48 = vmatprep.subr.mxu0 0.0
      %49 = vmatpush1.msra.mxu0 %v36
      %50 = vmatprep.subr.mxu0 0.0
      %51 = vmatpush1.msra.mxu0 %v37
      %52 = vmatprep.subr.mxu0 0.0
      %53 = vmatpush1.msra.mxu0 %v38
      %54 = vmatprep.subr.mxu0 0.0
      %55 = vmatpush1.msra.mxu0 0.0
      %56 = vmatprep.subr.mxu0 0.0
      %57 = vmatpush1.msra.mxu0 0.0
      %58 = vmatprep.subr.mxu0 0.0
      %59 = vmatpush1.msra.mxu0 0.0
      %60 = vmatprep.subr.mxu0 0.0
      %61 = vmatpush1.msra.mxu0 0.0
      %62 = vmatprep.subr.mxu0 0.0
      %63 = vmatpush1.msra.mxu0 0.0
      %64 = vmatprep.subr.mxu0 0.0
      %65 = vmatpush1.msra.mxu0 0.0
      %66 = vmatprep.subr.mxu0 0.0
      %67 = vmatpush1.msra.mxu0 0.0
      %68 = vmatprep.subr.mxu0 0.0
      %69 = vmatpush1.msra.mxu0 0.0
      %70 = vmatprep.subr.mxu0 0.0
      %71 = vmatpush1.msra.mxu0 0.0
      %72 = vmatprep.subr.mxu0 0.0
      %73 = vmatpush1.msra.mxu0 0.0
      %74 = vmatprep.subr.mxu0 0.0
      %75 = vmatpush1.msra.mxu0 0.0
      %76 = vmatprep.subr.mxu0 0.0
      %77 = vmatpush1.msra.mxu0 0.0
      %78 = vmatprep.subr.mxu0 0.0
      %79 = vmatpush1.msra.mxu0 0.0
      %80 = vmatprep.subr.mxu0 0.0
      %81 = vmatpush1.msra.mxu0 0.0
      %82 = vmatprep.subr.mxu0 0.0
      %83 = vmatpush1.msra.mxu0 0.0
      %84 = vmatprep.subr.mxu0 0.0
      %85 = vmatpush1.msra.mxu0 0.0
      %86 = vmatprep.subr.mxu0 0.0
      %87 = vmatpush1.msra.mxu0 0.0
      %88 = vmatprep.subr.mxu0 0.0
      %89 = vmatpush1.msra.mxu0 0.0
      %90 = vmatprep.subr.mxu0 0.0
      %91 = vmatpush1.msra.mxu0 0.0
      %92 = vmatprep.subr.mxu0 0.0
      %93 = vmatpush1.msra.mxu0 0.0
      %94 = vmatprep.subr.mxu0 0.0
      %95 = vmatpush1.msra.mxu0 0.0
      %96 = vmatprep.subr.mxu0 0.0
      %97 = vmatpush1.msra.mxu0 0.0
      %98 = vmatprep.subr.mxu0 0.0
      %99 = vmatpush1.msra.mxu0 0.0
      %100 = vmatprep.subr.mxu0 0.0
      %101 = vmatpush1.msra.mxu0 0.0
      %102 = vmatprep.subr.mxu0 0.0
      %103 = vmatpush1.msra.mxu0 0.0
      %104 = vmatprep.subr.mxu0 0.0
      %105 = vmatpush1.msra.mxu0 0.0
      %106 = vmatprep.subr.mxu0 0.0
      %107 = vmatpush1.msra.mxu0 0.0
      %108 = vmatprep.subr.mxu0 0.0
      %109 = vmatpush1.msra.mxu0 0.0
      %110 = vmatprep.mubr.f32.mxu0 0.0
      %111 = vmatmul.mubr.f32.gmra.mrb[0].mxu0 %v41
      %v112 = vpop.f32.mrb[0].mxu0
      %v113 = vadd.f32 0.0, %v112
      %v114 = vpop.f32.mrb[0].mxu0
      %115 = vmatprep.mubr.f32.mxu0 0.0
      %116 = vmatmul.mubr.f32.gmra.mrb[0].mxu0 %v44
      %v117 = vpop.f32.mrb[0].mxu0
      %v118 = vadd.f32 0.0, %v117
      %v119 = vpop.f32.mrb[0].mxu0
      %120 = vdwg.mxu0
      %vm121 = vcmask 31744
      %v122 = vsel %vm121, %v113, -inf
      %123 = vmax.xlane.f32.xlu0 %v122
      %v124 = vpop.xlane.xlu0 %123
      %v125 = vsel %vm121, %v118, -inf
      %126 = vmax.xlane.f32.xlu0 %v125
      %v127 = vpop.xlane.xlu0 %126
      %v128 = vsub.f32 %v113, %v124
      %v129 = vsub.f32 %v118, %v127
      %v130 = vmul.f32 %v128, 1.442695
      %v131 = vpow.pop %v130
      %v132 = vmul.f32 %v129, 1.442695
      %v133 = vpow.pop %v132
      %v134 = vsel %vm121, %v131, 0.0
      %135 = vadd.xlane.f32.xlu0 %v134
      %v136 = vpop.xlane.xlu0 %135
      %v137 = vsel %vm121, %v133, 0.0
      %138 = vadd.xlane.f32.xlu0 %v137
      %v139 = vpop.xlane.xlu0 %138
      %v140 = vrcp.pop %v136
      %v141 = vmul.f32 %v131, %v140
      %v142 = vrcp.pop %v139
      %v143 = vmul.f32 %v133, %v142
      %145 = vset.pattern.permute.xlu0 0
      %146 = vperm.xlu0 %145, %v141
      %v147 = vpop.permute.xlu0 %146
      %150 = vset.pattern.permute.xlu0 0
      %151 = vperm.xlu0 %150, %v143
      %v152 = vpop.permute.xlu0 %151
      %v154 = vmul.f32 %v147, %v33
      %v155 = vmul.f32 %v152, %v34
      %156 = vset.pattern.permute.xlu0 1
      %157 = vperm.xlu0 %156, %v141
      %v158 = vpop.permute.xlu0 %157
      %160 = vset.pattern.permute.xlu0 1
      %161 = vperm.xlu0 %160, %v143
      %v162 = vpop.permute.xlu0 %161
      %v164 = vmul.f32 %v158, %v33
      %v165 = vmul.f32 %v162, %v34
      %168 = vrot.lane.b32.xlu0 %v164, 112
      %v169 = vpop.permute.xlu0 %168
      %170 = vrot.lane.b32.xlu0 %v165, 112
      %v171 = vpop.permute.xlu0 %170
      %v174 = vadd.f32 %v154, %v169
      %v175 = vadd.f32 %v155, %v171
      %176 = vset.pattern.permute.xlu0 2
      %177 = vperm.xlu0 %176, %v141
      %v178 = vpop.permute.xlu0 %177
      %180 = vset.pattern.permute.xlu0 2
      %181 = vperm.xlu0 %180, %v143
      %v182 = vpop.permute.xlu0 %181
      %v184 = vmul.f32 %v178, %v33
      %v185 = vmul.f32 %v182, %v34
      %186 = vset.pattern.permute.xlu0 3
      %187 = vperm.xlu0 %186, %v141
      %v188 = vpop.permute.xlu0 %187
      %190 = vset.pattern.permute.xlu0 3
      %191 = vperm.xlu0 %190, %v143
      %v192 = vpop.permute.xlu0 %191
      %v194 = vmul.f32 %v188, %v33
      %v195 = vmul.f32 %v192, %v34
      %198 = vrot.lane.b32.xlu0 %v194, 112
      %v199 = vpop.permute.xlu0 %198
      %200 = vrot.lane.b32.xlu0 %v195, 112
      %v201 = vpop.permute.xlu0 %200
      %v204 = vadd.f32 %v184, %v199
      %v205 = vadd.f32 %v185, %v201
      %208 = vrot.lane.b32.xlu0 %v204, 16
      %v209 = vpop.permute.xlu0 %208
      %210 = vrot.lane.b32.xlu0 %v205, 16
      %v211 = vpop.permute.xlu0 %210
      %vm214 = vcmask 130048
      %v215 = vsel %vm214, %v174, %v209
      %v216 = vsel %vm214, %v175, %v211
      %217 = vst.msk [vmem:[#allocation2] sm:$0xff] %vm39, %v215
      %218 = vst.msk [vmem:[#allocation2 + $0x8] sm:$0xff] %vm39, %v216
    $region21: #{tpu_custom_call.1} parent=1 // pred_fallthru
      _
    %v219 = vld [vmem:[#allocation2] sm:$0xff]
    %v220 = vld [vmem:[#allocation2 + $0x8] sm:$0xff]
    %v221 = vld [vmem:[%s2] sm:$0xff]
    %v222 = vld [vmem:[%s2 + $0x8] sm:$0xff]
    %v223 = vld [vmem:[%s2 + $0x10] sm:$0xff]
    %v224 = vld [vmem:[%s2 + $0x18] sm:$0xff]
    %vm225 = vcmask 261120
    %v227 = vsel %vm225, %v219, 0
    %v230 = vsel %vm225, %v220, 0
    %232 = vmatprep.subr.mxu0 0.0
    %233 = vmatpush1.msra.mxu0 %v221
    %234 = vmatprep.subr.mxu0 0.0
    %235 = vmatpush1.msra.mxu0 %v222
    %236 = vmatprep.subr.mxu0 0.0
    %237 = vmatpush1.msra.mxu0 %v223
    %238 = vmatprep.subr.mxu0 0.0
    %239 = vmatpush1.msra.mxu0 %v224
    %240 = vmatprep.subr.mxu0 0.0
    %241 = vmatpush1.msra.mxu0 0.0
    %242 = vmatprep.subr.mxu0 0.0
    %243 = vmatpush1.msra.mxu0 0.0
    %244 = vmatprep.subr.mxu0 0.0
    %245 = vmatpush1.msra.mxu0 0.0
    %246 = vmatprep.subr.mxu0 0.0
    %247 = vmatpush1.msra.mxu0 0.0
    %248 = vmatprep.subr.mxu0 0.0
    %249 = vmatpush1.msra.mxu0 0.0
    %250 = vmatprep.subr.mxu0 0.0
    %251 = vmatpush1.msra.mxu0 0.0
    %252 = vmatprep.subr.mxu0 0.0
    %253 = vmatpush1.msra.mxu0 0.0
    %254 = vmatprep.subr.mxu0 0.0
    %255 = vmatpush1.msra.mxu0 0.0
    %256 = vmatprep.subr.mxu0 0.0
    %257 = vmatpush1.msra.mxu0 0.0
    %258 = vmatprep.subr.mxu0 0.0
    %259 = vmatpush1.msra.mxu0 0.0
    %260 = vmatprep.subr.mxu0 0.0
    %261 = vmatpush1.msra.mxu0 0.0
    %262 = vmatprep.subr.mxu0 0.0
    %263 = vmatpush1.msra.mxu0 0.0
    %264 = vmatprep.subr.mxu0 0.0
    %265 = vmatpush1.msra.mxu0 0.0
    %266 = vmatprep.subr.mxu0 0.0
    %267 = vmatpush1.msra.mxu0 0.0
    %268 = vmatprep.subr.mxu0 0.0
    %269 = vmatpush1.msra.mxu0 0.0
    %270 = vmatprep.subr.mxu0 0.0
    %271 = vmatpush1.msra.mxu0 0.0
    %272 = vmatprep.subr.mxu0 0.0
    %273 = vmatpush1.msra.mxu0 0.0
    %274 = vmatprep.subr.mxu0 0.0
    %275 = vmatpush1.msra.mxu0 0.0
    %276 = vmatprep.subr.mxu0 0.0
    %277 = vmatpush1.msra.mxu0 0.0
    %278 = vmatprep.subr.mxu0 0.0
    %279 = vmatpush1.msra.mxu0 0.0
    %280 = vmatprep.subr.mxu0 0.0
    %281 = vmatpush1.msra.mxu0 0.0
    %282 = vmatprep.subr.mxu0 0.0
    %283 = vmatpush1.msra.mxu0 0.0
    %284 = vmatprep.subr.mxu0 0.0
    %285 = vmatpush1.msra.mxu0 0.0
    %286 = vmatprep.subr.mxu0 0.0
    %287 = vmatpush1.msra.mxu0 0.0
    %288 = vmatprep.subr.mxu0 0.0
    %289 = vmatpush1.msra.mxu0 0.0
    %290 = vmatprep.subr.mxu0 0.0
    %291 = vmatpush1.msra.mxu0 0.0
    %292 = vmatprep.subr.mxu0 0.0
    %293 = vmatpush1.msra.mxu0 0.0
    %294 = vmatprep.subr.mxu0 0.0
    %295 = vmatpush1.msra.mxu0 0.0
    %296 = vmatprep.mubr.f32.mxu0 0.0
    %297 = vmatmul.mubr.f32.gmra.mrb[0].mxu0 %v227
    %v298 = vpop.f32.mrb[0].mxu0
    %v299 = vadd.f32 0.0, %v298
    %v300 = vpop.f32.mrb[0].mxu0
    %301 = vmatprep.mubr.f32.mxu0 0.0
    %302 = vmatmul.mubr.f32.gmra.mrb[0].mxu0 %v230
    %v303 = vpop.f32.mrb[0].mxu0
    %v304 = vadd.f32 0.0, %v303
    %v305 = vpop.f32.mrb[0].mxu0
    %306 = vdwg.mxu0
    %307 = vst [vmem:[#allocation6] sm:$0xff] %v299
    %308 = vst [vmem:[#allocation6 + $0x8] sm:$0xff] %v304
    // Predicated region
    $region22: #{tpu_custom_call.1} parent=1 // pred_check
      _
    $region23: #{tpu_custom_call.1} parent=1 // pred_check_branch
      %310 = sbr.rel (0) target = $region25
    $region24: #{tpu_custom_call.1} parent=1 // pred_region
      %s312 = ssub.s32 256, 256
      %313 = vsyncadd [#allocation5], %s312
      %s314 = sshll.u32 [#allocation6], 4
      %s315 = int_to_ptr.vmem [resolvable:$true] %s314
      %320 = dma.vmem_to_hbm [thread:$0]  %s315, 256, %s3, [#allocation5], 128, 128, 8
    $region25: #{tpu_custom_call.1} parent=1 // pred_fallthru
      _
    // Predicated region
    $region26: #{tpu_custom_call.1} parent=1 // pred_check
      _
    $region27: #{tpu_custom_call.1} parent=1 // pred_check_branch
      %322 = sbr.rel (0) target = $region29
    $region28: #{tpu_custom_call.1} parent=1 // pred_region
      %323 = dma.done [#allocation5], 256
    $region29: #{tpu_custom_call.1} parent=1 // pred_fallthru
      _
    %324 = vsyncpa [#allocation4], 1
    %325 = vsyncpa [#allocation5], 1

</llo_original>
